<compile_context>
chip_gen: v7x
topology: tpu7x:2x2x1
jax: 0.10.0
libtpu: 0.0.40
codegen_flags: <defaults>
</compile_context>

<pallas_src>
import functools

import jax
import jax.numpy as jnp
from jax.experimental import pallas as pl
from jax.experimental.pallas import tpu as pltpu


LOG_STD_MIN = -20.0
LOG_STD_MAX = 2.0


def _round_up(x, m):
    return ((x + m - 1) // m) * m


# --------------------------------------------------------------------------- #
# Kernel
# --------------------------------------------------------------------------- #
def make_actor_kernel(n_hidden, compute_dtype):
    """Fused Actor.forward kernel.

    Refs (per grid step):
      x_ref     : [TB, S]              state tile (original dtype, unpadded S)
      w0_ref    : [S, D]               layer-0 weight (compute_dtype)
      whid_ref  : [max(n_hidden-1,1), D, D]   hidden layers 1.. (compute_dtype)
      whead_ref : [D, D_out]           fused [mean | log_std] head (compute_dtype)
      bhid_ref  : [n_hidden, 1, D]     f32 hidden-layer biases
      head_ref  : [3, 1, D_out]        f32 rows: head bias, clamp lo, clamp hi
      o_ref     : [TB, D_out]          cols [:A] = mean, [A:2A] = clamped log_std
    """
    def kernel(x_ref, w0_ref, whid_ref, whead_ref, bhid_ref, head_ref, o_ref):
        x = x_ref[...].astype(compute_dtype)

        # layer 0: Linear + bias + ReLU (bias/ReLU in f32)
        acc = jnp.dot(x, w0_ref[...], preferred_element_type=jnp.float32)
        h = jnp.maximum(acc + bhid_ref[0], 0.0).astype(compute_dtype)

        # hidden layers 1 .. n_hidden-1
        for j in range(n_hidden - 1):
            acc = jnp.dot(h, whid_ref[j], preferred_element_type=jnp.float32)
            h = jnp.maximum(acc + bhid_ref[j + 1], 0.0).astype(compute_dtype)

        # fused head: [mean | log_std] in one matmul, bias + per-column clamp
        out = jnp.dot(h, whead_ref[...], preferred_element_type=jnp.float32)
        out = jnp.clip(out + head_ref[0], head_ref[1], head_ref[2])

        o_ref[...] = out.astype(o_ref.dtype)

    return kernel


# --------------------------------------------------------------------------- #
# Parameter packing (once, outside the hot path)
# --------------------------------------------------------------------------- #
def pack_actor_params(params, state_dim, action_dim, hidden_sizes,
                      compute_dtype=jnp.bfloat16, lane_multiple=128,
                      log_std_min=LOG_STD_MIN, log_std_max=LOG_STD_MAX):
    """Packs flat (w0,b0,w1,b1,...,wm,bm,ws,bs) params into padded buffers.

    lane_multiple: 128 is optimal for v5e (4x128 MXU); use 256 on v6e/v7x when
    real hidden sizes are >= 256 and not already 256-aligned.
    """
    n_hidden = len(hidden_sizes)
    D = _round_up(max(hidden_sizes), lane_multiple)
    D_out = _round_up(2 * action_dim, lane_multiple)

    hidden = [(params[2 * i], params[2 * i + 1]) for i in range(n_hidden)]
    wm, bm, ws, bs = params[2 * n_hidden:2 * n_hidden + 4]

    # layer-0 weight: [state_dim, D]  (state feature dim is NOT padded)
    w0, _ = hidden[0]
    W0 = jnp.zeros((state_dim, D), jnp.float32).at[:, :hidden_sizes[0]].set(w0)

    # middle hidden layers: [max(n_hidden-1, 1), D, D]
    slabs = []
    for j in range(1, n_hidden):
        wj, _ = hidden[j]
        slabs.append(jnp.zeros((D, D), jnp.float32)
                     .at[:hidden_sizes[j - 1], :hidden_sizes[j]].set(wj))
    if not slabs:
        # dummy slab for the single-hidden-layer config (never read by kernel)
        slabs.append(jnp.zeros((D, D), jnp.float32))
    W_hid = jnp.stack(slabs, axis=0)

    # fused head slab: [D, D_out] = [W_mean | W_log_std], zero-padded
    w_head = jnp.concatenate([wm, ws], axis=1)                   # [h_last, 2A]
    W_head = (jnp.zeros((D, D_out), jnp.float32)
              .at[:hidden_sizes[-1], :2 * action_dim].set(w_head))

    # hidden-layer biases (f32): [n_hidden, 1, D]
    brows = [jnp.zeros((1, D), jnp.float32).at[:, :hidden_sizes[j]].set(hidden[j][1])
             for j in range(n_hidden)]
    B_hid = jnp.stack(brows, axis=0)

    # head constants (f32): [3, 1, D_out] = bias row, clamp-lo row, clamp-hi row
    b_head = jnp.concatenate([bm, bs], axis=1)                   # [1, 2A]
    bias_row = jnp.zeros((1, D_out), jnp.float32).at[:, :2 * action_dim].set(b_head)
    col = jnp.arange(D_out)[None, :]
    is_logstd = (col >= action_dim) & (col < 2 * action_dim)
    lo_row = jnp.where(is_logstd, jnp.float32(log_std_min), -jnp.inf).astype(jnp.float32)
    hi_row = jnp.where(is_logstd, jnp.float32(log_std_max), jnp.inf).astype(jnp.float32)
    HEAD = jnp.stack([bias_row, lo_row, hi_row], axis=0)

    meta = dict(D=D, D_out=D_out, n_hidden=n_hidden, state_dim=state_dim,
                action_dim=action_dim, compute_dtype=compute_dtype)
    return (W0.astype(compute_dtype), W_hid.astype(compute_dtype),
            W_head.astype(compute_dtype), B_hid, HEAD, meta)


# --------------------------------------------------------------------------- #
# Forward wrapper
# --------------------------------------------------------------------------- #
def actor_forward(state, packed, *, block_batch=512, min_grid_steps=2,
                  out_dtype=jnp.float32):
    """Pallas-fused Actor.forward. Returns (mean, log_std) in `out_dtype`."""
    W0, W_hid, W_head, B_hid, HEAD, meta = packed
    D, D_out, n_hidden = meta["D"], meta["D_out"], meta["n_hidden"]
    action_dim = meta["action_dim"]
    compute_dtype = meta["compute_dtype"]

    batch, state_dim = state.shape
    assert state_dim == meta["state_dim"], "state_dim mismatch vs. packed params"

    # ---- balanced batch tiling --------------------------------------------
    nb = max(1, pl.cdiv(batch, block_batch))
    if batch >= 16:
        # >= 2 grid steps lets the "parallel" axis shard across both v7x TCs.
        nb = max(nb, min_grid_steps)
    TB = _round_up(pl.cdiv(batch, nb), 8)
    B_pad = nb * TB

    x = state
    if B_pad != batch:
        x = jnp.pad(x, ((0, B_pad - batch), (0, 0)))   # batch-rows-only pad

    kernel = make_actor_kernel(n_hidden, compute_dtype)

    # ---- cost / VMEM bookkeeping ------------------------------------------
    cd_item = jnp.dtype(compute_dtype).itemsize
    x_item = jnp.dtype(x.dtype).itemsize
    o_item = jnp.dtype(out_dtype).itemsize
    param_bytes = (W0.size * cd_item + W_hid.size * cd_item + W_head.size * cd_item
                   + B_hid.size * 4 + HEAD.size * 4)
    flops = 2 * B_pad * (state_dim * D + (n_hidden - 1) * D * D + D * D_out)
    bytes_accessed = B_pad * state_dim * x_item + param_bytes + B_pad * D_out * o_item
    cost = pl.CostEstimate(flops=flops, transcendentals=0,
                           bytes_accessed=bytes_accessed)

    def _vmem_limit(param_buf_copies):
        io_bufs = 2 * TB * state_dim * x_item + 2 * TB * D_out * o_item
        act_slack = TB * D * (4 + cd_item) * 2 + (2 << 20)
        need = param_buf_copies * param_bytes + io_bufs + act_slack
        if need <= (30 << 20):
            return None                      # default 32 MiB scoped VMEM is fine
        return min(_round_up(int(need * 1.25), 1 << 20), 100 << 20)

    def _make_call(single_buffer_params):
        if single_buffer_params:
            w_kwargs = {"pipeline_mode": pl.Buffered(1)}
            copies = 1
        else:
            w_kwargs = {}
            copies = 2
        cp_kwargs = {"dimension_semantics": ("parallel",)}
        lim = _vmem_limit(copies)
        if lim is not None:
            cp_kwargs["vmem_limit_bytes"] = lim
        return pl.pallas_call(
            kernel,
            out_shape=jax.ShapeDtypeStruct((B_pad, D_out), out_dtype),
            grid=(nb,),
            in_specs=[
                pl.BlockSpec((TB, state_dim), lambda i: (i, 0)),          # state tile
                pl.BlockSpec(W0.shape, lambda i: (0, 0), **w_kwargs),     # W0 (resident)
                pl.BlockSpec(W_hid.shape, lambda i: (0, 0, 0), **w_kwargs),
                pl.BlockSpec(W_head.shape, lambda i: (0, 0), **w_kwargs),
                pl.BlockSpec(B_hid.shape, lambda i: (0, 0, 0), **w_kwargs),
                pl.BlockSpec(HEAD.shape, lambda i: (0, 0, 0), **w_kwargs),
            ],
            out_specs=pl.BlockSpec((TB, D_out), lambda i: (i, 0)),
            compiler_params=pltpu.CompilerParams(**cp_kwargs),
            cost_estimate=cost,
        )

    try:
        out = _make_call(True)(x, W0, W_hid, W_head, B_hid, HEAD)
    except Exception:
        # Fallback: default (double-buffered) resident params if single-buffer
        # pipeline_mode is not supported by the installed Pallas version.
        out = _make_call(False)(x, W0, W_hid, W_head, B_hid, HEAD)

    mean = out[:batch, :action_dim]
    log_std = out[:batch, action_dim:2 * action_dim]
    return mean, log_std


# --------------------------------------------------------------------------- #
# Init (mirrors Actor.reset_parameters) and references
# --------------------------------------------------------------------------- #
def init_actor_params(key, state_dim, action_dim, hidden_sizes):
    """Deterministic init mirroring Actor.reset_parameters():
       - hidden layers: fanin_init weights (uniform +-1/sqrt(fan_in)), bias = 0.1
         (torch Linear weight is [out, in]; fanin_init uses size[0] == out as
          "fan_in" -> bound = 1/sqrt(out); kept intentionally)
       - mean head:    uniform +-0.003 (weight & bias)
       - log_std head: uniform +-0.001 (weight & bias)
       Weights are stored as [in, out] (transposed vs. torch)."""
    params = []
    in_size = state_dim
    keys = jax.random.split(key, len(hidden_sizes) + 2)

    for i, h in enumerate(hidden_sizes):
        bound = 1.0 / jnp.sqrt(jnp.float32(h))
        w = jax.random.uniform(keys[i], (in_size, h), jnp.float32, -bound, bound)
        b = jnp.full((1, h), 0.1, dtype=jnp.float32)
        params += [w, b]
        in_size = h

    init_w1 = 0.003
    k_m = keys[len(hidden_sizes)]
    wm = jax.random.uniform(k_m, (in_size, action_dim), jnp.float32, -init_w1, init_w1)
    bm = jax.random.uniform(jax.random.fold_in(k_m, 1), (1, action_dim),
                            jnp.float32, -init_w1, init_w1)

    init_w2 = 0.001
    k_s = keys[len(hidden_sizes) + 1]
    ws = jax.random.uniform(k_s, (in_size, action_dim), jnp.float32, -init_w2, init_w2)
    bs = jax.random.uniform(jax.random.fold_in(k_s, 1), (1, action_dim),
                            jnp.float32, -init_w2, init_w2)

    params += [wm, bm, ws, bs]
    return tuple(params)


def actor_forward_ref_f32(state, params):
    """Pure-f32 JAX reference (matches the PyTorch module semantics)."""
    n_hidden = (len(params) - 4) // 2
    h = state
    for i in range(n_hidden):
        w, b = params[2 * i], params[2 * i + 1]
        h = jnp.maximum(h @ w + b, 0.0)
    wm, bm, ws, bs = params[-4:]
    mean = h @ wm + bm
    log_std = jnp.clip(h @ ws + bs, LOG_STD_MIN, LOG_STD_MAX)
    return mean, log_std


def actor_forward_ref_mixed(state, params, compute_dtype=jnp.bfloat16):
    """Reference using the same bf16-operand / f32-accumulate math as the kernel."""
    n_hidden = (len(params) - 4) // 2
    h = state.astype(compute_dtype)
    for i in range(n_hidden):
        w, b = params[2 * i], params[2 * i + 1]
        acc = jnp.dot(h, w.astype(compute_dtype), preferred_element_type=jnp.float32)
        h = jnp.maximum(acc + b, 0.0).astype(compute_dtype)
    wm, bm, ws, bs = params[-4:]
    mean = jnp.dot(h, wm.astype(compute_dtype),
                   preferred_element_type=jnp.float32) + bm
    log_std = jnp.dot(h, ws.astype(compute_dtype),
                      preferred_element_type=jnp.float32) + bs
    return mean, jnp.clip(log_std, LOG_STD_MIN, LOG_STD_MAX)


# --------------------------------------------------------------------------- #
# Demo / correctness check
# --------------------------------------------------------------------------- #
if __name__ == "__main__":
    key = jax.random.PRNGKey(0)
    state_dim = 16
    action_dim = 8
    hidden_sizes = [32, 32]

    k_param, k_state = jax.random.split(key)
    params = init_actor_params(k_param, state_dim, action_dim, hidden_sizes)
    packed = pack_actor_params(params, state_dim, action_dim, hidden_sizes,
                               compute_dtype=jnp.bfloat16)

    def check(batch, block_batch):
        state = jax.random.normal(jax.random.fold_in(k_state, batch),
                                  (batch, state_dim), jnp.float32)
        mean, log_std = actor_forward(state, packed, block_batch=block_batch)
        jax.block_until_ready((mean, log_std))

        assert mean.shape == (batch, action_dim)
        assert log_std.shape == (batch, action_dim)

        # Tight check vs. identical bf16-operand / f32-accumulate math.
        mean_mx, log_std_mx = actor_forward_ref_mixed(state, params)
        assert jnp.allclose(mean, mean_mx, atol=1e-4, rtol=1e-3), "mean mismatch (mixed ref)"
        assert jnp.allclose(log_std, log_std_mx, atol=1e-4, rtol=1e-3), "log_std mismatch (mixed ref)"

        # Loose semantic check vs. the pure-f32 (PyTorch-equivalent) math.
        mean_f32, log_std_f32 = actor_forward_ref_f32(state, params)
        assert jnp.allclose(mean, mean_f32, atol=2e-2, rtol=2e-2), "mean mismatch (f32 ref)"
        assert jnp.allclose(log_std, log_std_f32, atol=2e-2, rtol=2e-2), "log_std mismatch (f32 ref)"

    # small batch: single grid step, no batch padding
    check(batch=8, block_batch=512)
    # ragged batch: multiple grid steps + batch-row padding path
    check(batch=20, block_batch=8)

    # TODO(synk): getAction/getlogprob (Normal sampling, tanh squash, log_prob)
    # are not part of forward() and are left to plain JAX outside the kernel.
    print("KERNEL_OK")
</pallas_src>

<mosaic_0001>
module attributes {stable_mosaic.version = 11 : i64} {
  func.func @kernel(%arg0: i32, %arg1: memref<8x16xf32, #tpu.memory_space<vmem>>, %arg2: memref<16x128xbf16, #tpu.memory_space<vmem>>, %arg3: memref<1x128x128xbf16, #tpu.memory_space<vmem>>, %arg4: memref<128x128xbf16, #tpu.memory_space<vmem>>, %arg5: memref<2x1x128xf32, #tpu.memory_space<vmem>>, %arg6: memref<3x1x128xf32, #tpu.memory_space<vmem>>, %arg7: memref<8x128xf32, #tpu.memory_space<vmem>>) attributes {dimension_semantics = [#tpu.dimension_semantics<parallel>], iteration_bounds = array<i64: 1>, scalar_prefetch = 0 : i64, scratch_operands = 0 : i64, tpu.core_type = #tpu.core_type<tc>, window_params = [{transform_indices = @transform_0, window_bounds = array<i64: 8, 16>}, {pipeline_mode = #tpu.pipeline_mode<synchronous>, transform_indices = @transform_1, window_bounds = array<i64: 16, 128>}, {pipeline_mode = #tpu.pipeline_mode<synchronous>, transform_indices = @transform_2, window_bounds = array<i64: 1, 128, 128>}, {pipeline_mode = #tpu.pipeline_mode<synchronous>, transform_indices = @transform_3, window_bounds = array<i64: 128, 128>}, {pipeline_mode = #tpu.pipeline_mode<synchronous>, transform_indices = @transform_4, window_bounds = array<i64: 2, 1, 128>}, {pipeline_mode = #tpu.pipeline_mode<synchronous>, transform_indices = @transform_5, window_bounds = array<i64: 3, 1, 128>}, {transform_indices = @transform_6, window_bounds = array<i64: 8, 128>}]} {
    %c0 = arith.constant 0 : index
    %c0_0 = arith.constant 0 : index
    %0 = vector.load %arg1[%c0, %c0_0] : memref<8x16xf32, #tpu.memory_space<vmem>>, vector<8x16xf32>
    %1 = arith.truncf %0 : vector<8x16xf32> to vector<8x16xbf16>
    %c0_1 = arith.constant 0 : index
    %c0_2 = arith.constant 0 : index
    %2 = vector.load %arg2[%c0_1, %c0_2] : memref<16x128xbf16, #tpu.memory_space<vmem>>, vector<16x128xbf16>
    %cst = arith.constant dense<0.000000e+00> : vector<8x128xf32>
    %3 = tpu.matmul %1, %2, %cst {dimension_numbers = #tpu.dot_dimension_numbers<[1], [0], [0], [1], [0, 0, 1, 1], [], []>} : vector<8x16xbf16>, vector<16x128xbf16>, vector<8x128xf32> -> vector<8x128xf32>
    %c0_3 = arith.constant 0 : index
    %c0_4 = arith.constant 0 : index
    %c0_5 = arith.constant 0 : index
    %4 = vector.load %arg5[%c0_3, %c0_4, %c0_5] : memref<2x1x128xf32, #tpu.memory_space<vmem>>, vector<1x1x128xf32>
    %5 = vector.shape_cast %4 : vector<1x1x128xf32> to vector<1x128xf32>
    %6 = vector.broadcast %5 : vector<1x128xf32> to vector<8x128xf32>
    %7 = arith.addf %3, %6 : vector<8x128xf32>
    %cst_6 = arith.constant 0.000000e+00 : f32
    %8 = vector.broadcast %cst_6 : f32 to vector<8x128xf32>
    %9 = arith.maximumf %7, %8 : vector<8x128xf32>
    %10 = arith.truncf %9 : vector<8x128xf32> to vector<8x128xbf16>
    %c0_7 = arith.constant 0 : index
    %c0_8 = arith.constant 0 : index
    %c0_9 = arith.constant 0 : index
    %11 = vector.load %arg3[%c0_7, %c0_8, %c0_9] : memref<1x128x128xbf16, #tpu.memory_space<vmem>>, vector<1x128x128xbf16>
    %12 = vector.shape_cast %11 : vector<1x128x128xbf16> to vector<128x128xbf16>
    %cst_10 = arith.constant dense<0.000000e+00> : vector<8x128xf32>
    %13 = tpu.matmul %10, %12, %cst_10 {dimension_numbers = #tpu.dot_dimension_numbers<[1], [0], [0], [1], [0, 0, 1, 1], [], []>} : vector<8x128xbf16>, vector<128x128xbf16>, vector<8x128xf32> -> vector<8x128xf32>
    %c1 = arith.constant 1 : index
    %c0_11 = arith.constant 0 : index
    %c0_12 = arith.constant 0 : index
    %14 = vector.load %arg5[%c1, %c0_11, %c0_12] : memref<2x1x128xf32, #tpu.memory_space<vmem>>, vector<1x1x128xf32>
    %15 = vector.shape_cast %14 : vector<1x1x128xf32> to vector<1x128xf32>
    %16 = vector.broadcast %15 : vector<1x128xf32> to vector<8x128xf32>
    %17 = arith.addf %13, %16 : vector<8x128xf32>
    %cst_13 = arith.constant 0.000000e+00 : f32
    %18 = vector.broadcast %cst_13 : f32 to vector<8x128xf32>
    %19 = arith.maximumf %17, %18 : vector<8x128xf32>
    %20 = arith.truncf %19 : vector<8x128xf32> to vector<8x128xbf16>
    %c0_14 = arith.constant 0 : index
    %c0_15 = arith.constant 0 : index
    %21 = vector.load %arg4[%c0_14, %c0_15] : memref<128x128xbf16, #tpu.memory_space<vmem>>, vector<128x128xbf16>
    %cst_16 = arith.constant dense<0.000000e+00> : vector<8x128xf32>
    %22 = tpu.matmul %20, %21, %cst_16 {dimension_numbers = #tpu.dot_dimension_numbers<[1], [0], [0], [1], [0, 0, 1, 1], [], []>} : vector<8x128xbf16>, vector<128x128xbf16>, vector<8x128xf32> -> vector<8x128xf32>
    %c0_17 = arith.constant 0 : index
    %c0_18 = arith.constant 0 : index
    %c0_19 = arith.constant 0 : index
    %23 = vector.load %arg6[%c0_17, %c0_18, %c0_19] : memref<3x1x128xf32, #tpu.memory_space<vmem>>, vector<1x1x128xf32>
    %24 = vector.shape_cast %23 : vector<1x1x128xf32> to vector<1x128xf32>
    %25 = vector.broadcast %24 : vector<1x128xf32> to vector<8x128xf32>
    %26 = arith.addf %22, %25 : vector<8x128xf32>
    %c1_20 = arith.constant 1 : index
    %c0_21 = arith.constant 0 : index
    %c0_22 = arith.constant 0 : index
    %27 = vector.load %arg6[%c1_20, %c0_21, %c0_22] : memref<3x1x128xf32, #tpu.memory_space<vmem>>, vector<1x1x128xf32>
    %28 = vector.shape_cast %27 : vector<1x1x128xf32> to vector<1x128xf32>
    %c2 = arith.constant 2 : index
    %c0_23 = arith.constant 0 : index
    %c0_24 = arith.constant 0 : index
    %29 = vector.load %arg6[%c2, %c0_23, %c0_24] : memref<3x1x128xf32, #tpu.memory_space<vmem>>, vector<1x1x128xf32>
    %30 = vector.shape_cast %29 : vector<1x1x128xf32> to vector<1x128xf32>
    %31 = vector.broadcast %28 : vector<1x128xf32> to vector<8x128xf32>
    %32 = arith.maximumf %31, %26 : vector<8x128xf32>
    %33 = vector.broadcast %30 : vector<1x128xf32> to vector<8x128xf32>
    %34 = arith.minimumf %33, %32 : vector<8x128xf32>
    %c0_25 = arith.constant 0 : index
    %c0_26 = arith.constant 0 : index
    %35 = vector.load %arg7[%c0_25, %c0_26] : memref<8x128xf32, #tpu.memory_space<vmem>>, vector<8x128xf32>
    tpu.vector_store %arg7[%c0_25, %c0_26], %34 {strides = array<i32>} : memref<8x128xf32, #tpu.memory_space<vmem>>, vector<8x128xf32>,
    return
  }
  func.func @transform_0(%arg0: i32) -> (i32, i32) {
    %c0_i32 = arith.constant 0 : i32
    %c0_i32_0 = arith.constant 0 : i32
    return %arg0, %c0_i32 : i32, i32
  }
  func.func @transform_1(%arg0: i32) -> (i32, i32) {
    %c0_i32 = arith.constant 0 : i32
    %c0_i32_0 = arith.constant 0 : i32
    %c0_i32_1 = arith.constant 0 : i32
    return %c0_i32, %c0_i32_0 : i32, i32
  }
  func.func @transform_2(%arg0: i32) -> (i32, i32, i32) {
    %c0_i32 = arith.constant 0 : i32
    %c0_i32_0 = arith.constant 0 : i32
    %c0_i32_1 = arith.constant 0 : i32
    %c0_i32_2 = arith.constant 0 : i32
    return %c0_i32, %c0_i32_0, %c0_i32_1 : i32, i32, i32
  }
  func.func @transform_3(%arg0: i32) -> (i32, i32) {
    %c0_i32 = arith.constant 0 : i32
    %c0_i32_0 = arith.constant 0 : i32
    %c0_i32_1 = arith.constant 0 : i32
    return %c0_i32, %c0_i32_0 : i32, i32
  }
  func.func @transform_4(%arg0: i32) -> (i32, i32, i32) {
    %c0_i32 = arith.constant 0 : i32
    %c0_i32_0 = arith.constant 0 : i32
    %c0_i32_1 = arith.constant 0 : i32
    %c0_i32_2 = arith.constant 0 : i32
    return %c0_i32, %c0_i32_0, %c0_i32_1 : i32, i32, i32
  }
  func.func @transform_5(%arg0: i32) -> (i32, i32, i32) {
    %c0_i32 = arith.constant 0 : i32
    %c0_i32_0 = arith.constant 0 : i32
    %c0_i32_1 = arith.constant 0 : i32
    %c0_i32_2 = arith.constant 0 : i32
    return %c0_i32, %c0_i32_0, %c0_i32_1 : i32, i32, i32
  }
  func.func @transform_6(%arg0: i32) -> (i32, i32) {
    %c0_i32 = arith.constant 0 : i32
    %c0_i32_0 = arith.constant 0 : i32
    return %arg0, %c0_i32 : i32, i32
  }
}

module attributes {stable_mosaic.version = 11 : i64} {
  func.func @kernel(%arg0: i32, %arg1: memref<8x16xf32, #tpu.memory_space<vmem>>, %arg2: memref<16x128xbf16, #tpu.memory_space<vmem>>, %arg3: memref<1x128x128xbf16, #tpu.memory_space<vmem>>, %arg4: memref<128x128xbf16, #tpu.memory_space<vmem>>, %arg5: memref<2x1x128xf32, #tpu.memory_space<vmem>>, %arg6: memref<3x1x128xf32, #tpu.memory_space<vmem>>, %arg7: memref<8x128xf32, #tpu.memory_space<vmem>>) attributes {dimension_semantics = [#tpu.dimension_semantics<parallel>], iteration_bounds = array<i64: 1>, scalar_prefetch = 0 : i64, scratch_operands = 0 : i64, tpu.core_type = #tpu.core_type<tc>, window_params = [{transform_indices = @transform_0, window_bounds = array<i64: 8, 16>}, {pipeline_mode = #tpu.pipeline_mode<synchronous>, transform_indices = @transform_1, window_bounds = array<i64: 16, 128>}, {pipeline_mode = #tpu.pipeline_mode<synchronous>, transform_indices = @transform_2, window_bounds = array<i64: 1, 128, 128>}, {pipeline_mode = #tpu.pipeline_mode<synchronous>, transform_indices = @transform_3, window_bounds = array<i64: 128, 128>}, {pipeline_mode = #tpu.pipeline_mode<synchronous>, transform_indices = @transform_4, window_bounds = array<i64: 2, 1, 128>}, {pipeline_mode = #tpu.pipeline_mode<synchronous>, transform_indices = @transform_5, window_bounds = array<i64: 3, 1, 128>}, {transform_indices = @transform_6, window_bounds = array<i64: 8, 128>}]} {
    %c0 = arith.constant 0 : index
    %c0_0 = arith.constant 0 : index
    %0 = vector.load %arg1[%c0, %c0_0] : memref<8x16xf32, #tpu.memory_space<vmem>>, vector<8x16xf32>
    %1 = arith.truncf %0 : vector<8x16xf32> to vector<8x16xbf16>
    %c0_1 = arith.constant 0 : index
    %c0_2 = arith.constant 0 : index
    %2 = vector.load %arg2[%c0_1, %c0_2] : memref<16x128xbf16, #tpu.memory_space<vmem>>, vector<16x128xbf16>
    %cst = arith.constant dense<0.000000e+00> : vector<8x128xf32>
    %3 = tpu.matmul %1, %2, %cst {dimension_numbers = #tpu.dot_dimension_numbers<[1], [0], [0], [1], [0, 0, 1, 1], [], []>} : vector<8x16xbf16>, vector<16x128xbf16>, vector<8x128xf32> -> vector<8x128xf32>
    %c0_3 = arith.constant 0 : index
    %c0_4 = arith.constant 0 : index
    %c0_5 = arith.constant 0 : index
    %4 = vector.load %arg5[%c0_3, %c0_4, %c0_5] : memref<2x1x128xf32, #tpu.memory_space<vmem>>, vector<1x1x128xf32>
    %5 = vector.shape_cast %4 : vector<1x1x128xf32> to vector<1x128xf32>
    %6 = vector.broadcast %5 : vector<1x128xf32> to vector<8x128xf32>
    %7 = arith.addf %3, %6 : vector<8x128xf32>
    %cst_6 = arith.constant 0.000000e+00 : f32
    %8 = vector.broadcast %cst_6 : f32 to vector<8x128xf32>
    %9 = arith.maximumf %7, %8 : vector<8x128xf32>
    %10 = arith.truncf %9 : vector<8x128xf32> to vector<8x128xbf16>
    %c0_7 = arith.constant 0 : index
    %c0_8 = arith.constant 0 : index
    %c0_9 = arith.constant 0 : index
    %11 = vector.load %arg3[%c0_7, %c0_8, %c0_9] : memref<1x128x128xbf16, #tpu.memory_space<vmem>>, vector<1x128x128xbf16>
    %12 = vector.shape_cast %11 : vector<1x128x128xbf16> to vector<128x128xbf16>
    %cst_10 = arith.constant dense<0.000000e+00> : vector<8x128xf32>
    %13 = tpu.matmul %10, %12, %cst_10 {dimension_numbers = #tpu.dot_dimension_numbers<[1], [0], [0], [1], [0, 0, 1, 1], [], []>} : vector<8x128xbf16>, vector<128x128xbf16>, vector<8x128xf32> -> vector<8x128xf32>
    %c1 = arith.constant 1 : index
    %c0_11 = arith.constant 0 : index
    %c0_12 = arith.constant 0 : index
    %14 = vector.load %arg5[%c1, %c0_11, %c0_12] : memref<2x1x128xf32, #tpu.memory_space<vmem>>, vector<1x1x128xf32>
    %15 = vector.shape_cast %14 : vector<1x1x128xf32> to vector<1x128xf32>
    %16 = vector.broadcast %15 : vector<1x128xf32> to vector<8x128xf32>
    %17 = arith.addf %13, %16 : vector<8x128xf32>
    %cst_13 = arith.constant 0.000000e+00 : f32
    %18 = vector.broadcast %cst_13 : f32 to vector<8x128xf32>
    %19 = arith.maximumf %17, %18 : vector<8x128xf32>
    %20 = arith.truncf %19 : vector<8x128xf32> to vector<8x128xbf16>
    %c0_14 = arith.constant 0 : index
    %c0_15 = arith.constant 0 : index
    %21 = vector.load %arg4[%c0_14, %c0_15] : memref<128x128xbf16, #tpu.memory_space<vmem>>, vector<128x128xbf16>
    %cst_16 = arith.constant dense<0.000000e+00> : vector<8x128xf32>
    %22 = tpu.matmul %20, %21, %cst_16 {dimension_numbers = #tpu.dot_dimension_numbers<[1], [0], [0], [1], [0, 0, 1, 1], [], []>} : vector<8x128xbf16>, vector<128x128xbf16>, vector<8x128xf32> -> vector<8x128xf32>
    %c0_17 = arith.constant 0 : index
    %c0_18 = arith.constant 0 : index
    %c0_19 = arith.constant 0 : index
    %23 = vector.load %arg6[%c0_17, %c0_18, %c0_19] : memref<3x1x128xf32, #tpu.memory_space<vmem>>, vector<1x1x128xf32>
    %24 = vector.shape_cast %23 : vector<1x1x128xf32> to vector<1x128xf32>
    %25 = vector.broadcast %24 : vector<1x128xf32> to vector<8x128xf32>
    %26 = arith.addf %22, %25 : vector<8x128xf32>
    %c1_20 = arith.constant 1 : index
    %c0_21 = arith.constant 0 : index
    %c0_22 = arith.constant 0 : index
    %27 = vector.load %arg6[%c1_20, %c0_21, %c0_22] : memref<3x1x128xf32, #tpu.memory_space<vmem>>, vector<1x1x128xf32>
    %28 = vector.shape_cast %27 : vector<1x1x128xf32> to vector<1x128xf32>
    %c2 = arith.constant 2 : index
    %c0_23 = arith.constant 0 : index
    %c0_24 = arith.constant 0 : index
    %29 = vector.load %arg6[%c2, %c0_23, %c0_24] : memref<3x1x128xf32, #tpu.memory_space<vmem>>, vector<1x1x128xf32>
    %30 = vector.shape_cast %29 : vector<1x1x128xf32> to vector<1x128xf32>
    %31 = vector.broadcast %28 : vector<1x128xf32> to vector<8x128xf32>
    %32 = arith.maximumf %31, %26 : vector<8x128xf32>
    %33 = vector.broadcast %30 : vector<1x128xf32> to vector<8x128xf32>
    %34 = arith.minimumf %33, %32 : vector<8x128xf32>
    %c0_25 = arith.constant 0 : index
    %c0_26 = arith.constant 0 : index
    %35 = vector.load %arg7[%c0_25, %c0_26] : memref<8x128xf32, #tpu.memory_space<vmem>>, vector<8x128xf32>
    tpu.vector_store %arg7[%c0_25, %c0_26], %34 {strides = array<i32>} : memref<8x128xf32, #tpu.memory_space<vmem>>, vector<8x128xf32>,
    return
  }
  func.func @transform_0(%arg0: i32) -> (i32, i32) {
    %c0_i32 = arith.constant 0 : i32
    %c0_i32_0 = arith.constant 0 : i32
    return %arg0, %c0_i32 : i32, i32
  }
  func.func @transform_1(%arg0: i32) -> (i32, i32) {
    %c0_i32 = arith.constant 0 : i32
    %c0_i32_0 = arith.constant 0 : i32
    %c0_i32_1 = arith.constant 0 : i32
    return %c0_i32, %c0_i32_0 : i32, i32
  }
  func.func @transform_2(%arg0: i32) -> (i32, i32, i32) {
    %c0_i32 = arith.constant 0 : i32
    %c0_i32_0 = arith.constant 0 : i32
    %c0_i32_1 = arith.constant 0 : i32
    %c0_i32_2 = arith.constant 0 : i32
    return %c0_i32, %c0_i32_0, %c0_i32_1 : i32, i32, i32
  }
  func.func @transform_3(%arg0: i32) -> (i32, i32) {
    %c0_i32 = arith.constant 0 : i32
    %c0_i32_0 = arith.constant 0 : i32
    %c0_i32_1 = arith.constant 0 : i32
    return %c0_i32, %c0_i32_0 : i32, i32
  }
  func.func @transform_4(%arg0: i32) -> (i32, i32, i32) {
    %c0_i32 = arith.constant 0 : i32
    %c0_i32_0 = arith.constant 0 : i32
    %c0_i32_1 = arith.constant 0 : i32
    %c0_i32_2 = arith.constant 0 : i32
    return %c0_i32, %c0_i32_0, %c0_i32_1 : i32, i32, i32
  }
  func.func @transform_5(%arg0: i32) -> (i32, i32, i32) {
    %c0_i32 = arith.constant 0 : i32
    %c0_i32_0 = arith.constant 0 : i32
    %c0_i32_1 = arith.constant 0 : i32
    %c0_i32_2 = arith.constant 0 : i32
    return %c0_i32, %c0_i32_0, %c0_i32_1 : i32, i32, i32
  }
  func.func @transform_6(%arg0: i32) -> (i32, i32) {
    %c0_i32 = arith.constant 0 : i32
    %c0_i32_0 = arith.constant 0 : i32
    return %arg0, %c0_i32 : i32, i32
  }
}

</mosaic_0001>

<llo_original>
// kernel: tpu_custom_call.1
$region0: #{tpu_custom_call.1}
  #allocation0 [shape = 'u32[]', space=smem, size = 0x4, offset = 0x4, fixed_abs, tag = 'smem constant byte address 0x4 - core index']
  #allocation1 [shape = 'u32[144,128]{1,0:T(1,128)}', space=vmem, size = 0x12000, scoped, tag = 'internal scratch']
  %s0 = inlined_call_operand.hbm [shape: f32[8,16], index: 0, kind: input, shape index: {}]
  %s1 = inlined_call_operand.hbm [shape: bf16[16,128], index: 1, kind: input, shape index: {}]
  %s2 = inlined_call_operand.hbm [shape: bf16[1,128,128], index: 2, kind: input, shape index: {}]
  %s3 = inlined_call_operand.hbm [shape: bf16[128,128], index: 3, kind: input, shape index: {}]
  %s4 = inlined_call_operand.vmem [shape: f32[2,1,128], index: 4, kind: input, shape index: {}]
  %s5 = inlined_call_operand.vmem [shape: f32[3,1,128], index: 5, kind: input, shape index: {}]
  %s6 = inlined_call_operand.hbm [shape: f32[8,128], index: 6, kind: output, shape index: {}]
  %s7 = sld [smem:[#allocation0]]
  $region50: #{tpu_custom_call.1} parent=0
    _
  %s9 = ssub.s32 1, %s7
  %s10 = scalar_select 0, %s9, %s7
  $region1: #{tpu_custom_call.1} parent=0
    #allocation2 [shape = 'u8[4096]{0}', space=vmem, size = 0x1000, scoped, tag = 'input window, operand 0, single buffered']
    #allocation3 [shape = 's32[1]{0}', space=sflag, size = 0x4, scoped, tag = 'scoped memory for tpu_custom_call.1']
    #allocation4 [shape = 's32[1]{0}', space=sflag, size = 0x4, scoped, tag = 'scoped memory for tpu_custom_call.1']
    #allocation5 [shape = 'u8[4096]{0}', space=vmem, size = 0x1000, scoped, tag = 'input window, operand 1, single buffered']
    #allocation6 [shape = 's32[1]{0}', space=sflag, size = 0x4, scoped, tag = 'scoped memory for tpu_custom_call.1']
    #allocation7 [shape = 'u8[32768]{0}', space=vmem, size = 0x8000, scoped, tag = 'input window, operand 2, single buffered']
    #allocation8 [shape = 'u8[32768]{0}', space=vmem, size = 0x8000, scoped, tag = 'input window, operand 3, single buffered']
    #allocation9 [shape = 's32[1]{0}', space=sflag, size = 0x4, scoped, tag = 'scoped memory for tpu_custom_call.1']
    #allocation10 [shape = 'u8[4096]{0}', space=vmem, size = 0x1000, scoped, tag = 'output window, operand 0, single buffered']
    %11 = vsyncpa [#allocation3], 0
    %12 = vsyncpa [#allocation6], 0
    %13 = vsyncpa [#allocation9], 0
    %14 = vsyncpa [#allocation4], 0
    // Predicated region
    $region2: #{tpu_custom_call.1} parent=1 // pred_check
      _
    $region3: #{tpu_custom_call.1} parent=1 // pred_check_branch
      %16 = sbr.rel (0) target = $region5
    $region4: #{tpu_custom_call.1} parent=1 // pred_region
      %s18 = ssub.s32 128, 128
      %19 = vsyncadd [#allocation3], %s18
      %s21 = sshll.u32 [#allocation2], 4
      %s22 = int_to_ptr.vmem [resolvable:$true] %s21
      %24 = dma.hbm_to_vmem [thread:$0]  %s0, 128, %s22, [#allocation3]
    $region5: #{tpu_custom_call.1} parent=1 // pred_fallthru
      _
    // Predicated region
    $region6: #{tpu_custom_call.1} parent=1 // pred_check
      _
    $region7: #{tpu_custom_call.1} parent=1 // pred_check_branch
      %26 = sbr.rel (0) target = $region9
    $region8: #{tpu_custom_call.1} parent=1 // pred_region
      %s28 = ssub.s32 128, 128
      %29 = vsyncadd [#allocation6], %s28
      %s30 = sshll.u32 [#allocation5], 4
      %s31 = int_to_ptr.vmem [resolvable:$true] %s30
      %36 = dma.hbm_to_vmem [thread:$0]  %s1, 128, %s31, [#allocation6], 64, 64, 4
    $region9: #{tpu_custom_call.1} parent=1 // pred_fallthru
      _
    // Predicated region
    $region10: #{tpu_custom_call.1} parent=1 // pred_check
      _
    $region11: #{tpu_custom_call.1} parent=1 // pred_check_branch
      %38 = sbr.rel (0) target = $region13
    $region12: #{tpu_custom_call.1} parent=1 // pred_region
      %s40 = ssub.s32 1024, 1024
      %41 = vsyncadd [#allocation6], %s40
      %s42 = sshll.u32 [#allocation7], 4
      %s43 = int_to_ptr.vmem [resolvable:$true] %s42
      %48 = dma.hbm_to_vmem [thread:$0]  %s2, 1024, %s43, [#allocation6], 64, 64, 4
    $region13: #{tpu_custom_call.1} parent=1 // pred_fallthru
      _
    // Predicated region
    $region14: #{tpu_custom_call.1} parent=1 // pred_check
      _
    $region15: #{tpu_custom_call.1} parent=1 // pred_check_branch
      %50 = sbr.rel (0) target = $region17
    $region16: #{tpu_custom_call.1} parent=1 // pred_region
      %s52 = ssub.s32 1024, 1024
      %53 = vsyncadd [#allocation9], %s52
      %s54 = sshll.u32 [#allocation8], 4
      %s55 = int_to_ptr.vmem [resolvable:$true] %s54
      %60 = dma.hbm_to_vmem [thread:$0]  %s3, 1024, %s55, [#allocation9], 64, 64, 4
    $region17: #{tpu_custom_call.1} parent=1 // pred_fallthru
      _
    // Predicated region
    $region18: #{tpu_custom_call.1} parent=1 // pred_check
      _
    $region19: #{tpu_custom_call.1} parent=1 // pred_check_branch
      %62 = sbr.rel (0) target = $region21
    $region20: #{tpu_custom_call.1} parent=1 // pred_region
      _
    $region21: #{tpu_custom_call.1} parent=1 // pred_fallthru
      _
    // Predicated region
    $region22: #{tpu_custom_call.1} parent=1 // pred_check
      _
    $region23: #{tpu_custom_call.1} parent=1 // pred_check_branch
      %64 = sbr.rel (0) target = $region25
    $region24: #{tpu_custom_call.1} parent=1 // pred_region
      _
    $region25: #{tpu_custom_call.1} parent=1 // pred_fallthru
      _
    // Predicated region
    $region26: #{tpu_custom_call.1} parent=1 // pred_check
      _
    $region27: #{tpu_custom_call.1} parent=1 // pred_check_branch
      %66 = sbr.rel (0) target = $region29
    $region28: #{tpu_custom_call.1} parent=1 // pred_region
      %67 = dma.done [#allocation3], 128
    $region29: #{tpu_custom_call.1} parent=1 // pred_fallthru
      _
    // Predicated region
    $region30: #{tpu_custom_call.1} parent=1 // pred_check
      _
    $region31: #{tpu_custom_call.1} parent=1 // pred_check_branch
      %69 = sbr.rel (0) target = $region33
    $region32: #{tpu_custom_call.1} parent=1 // pred_region
      %70 = dma.done [#allocation6], 128
    $region33: #{tpu_custom_call.1} parent=1 // pred_fallthru
      _
    // Predicated region
    $region34: #{tpu_custom_call.1} parent=1 // pred_check
      _
    $region35: #{tpu_custom_call.1} parent=1 // pred_check_branch
      %72 = sbr.rel (0) target = $region37
    $region36: #{tpu_custom_call.1} parent=1 // pred_region
      %73 = dma.done [#allocation6], 1024
    $region37: #{tpu_custom_call.1} parent=1 // pred_fallthru
      _
    // Predicated region
    $region38: #{tpu_custom_call.1} parent=1 // pred_check
      _
    $region39: #{tpu_custom_call.1} parent=1 // pred_check_branch
      %75 = sbr.rel (0) target = $region41
    $region40: #{tpu_custom_call.1} parent=1 // pred_region
      %76 = dma.done [#allocation9], 1024
    $region41: #{tpu_custom_call.1} parent=1 // pred_fallthru
      _
    %v78 = vld [vmem:[#allocation2] sm:$0xff]
    %v79 = vpack.c.bf16 %v78, %v78
    %v80 = vld [vmem:[#allocation5] sm:$0xf]
    %v81 = vld [vmem:[#allocation5 + $0x4] sm:$0xf]
    %v82 = vld [vmem:[%s4] sm:$0x1]
    %v84 = vlaneseq
    %v85 = vshrl.u32 %v84, 7
    %v86 = vsub.s32 0, %v85
    %v87 = vrot.slane %v82, %v86
    %v91 = vunpack.c.l.b16 %v80
    %v92 = vunpack.c.l.b16 %v81
    %v93 = vpack.c.b16 %v92, %v91
    %vm95 = vcmask 130048
    %v97 = vsel %vm95, %v79, 0
    %99 = vmatprep.subr.bf16.mxu0 0
    %100 = vmatpush1.bf16.msra.mxu0 %v93
    %101 = vmatprep.subr.bf16.mxu0 0
    %102 = vmatpush1.bf16.msra.mxu0 0
    %103 = vmatprep.subr.bf16.mxu0 0
    %104 = vmatpush1.bf16.msra.mxu0 0
    %105 = vmatprep.subr.bf16.mxu0 0
    %106 = vmatpush1.bf16.msra.mxu0 0
    %107 = vmatprep.subr.bf16.mxu0 0
    %108 = vmatpush1.bf16.msra.mxu0 0
    %109 = vmatprep.subr.bf16.mxu0 0
    %110 = vmatpush1.bf16.msra.mxu0 0
    %111 = vmatprep.subr.bf16.mxu0 0
    %112 = vmatpush1.bf16.msra.mxu0 0
    %113 = vmatprep.subr.bf16.mxu0 0
    %114 = vmatpush1.bf16.msra.mxu0 0
    %115 = vmatprep.subr.bf16.mxu0 0
    %116 = vmatpush1.bf16.msra.mxu0 0
    %117 = vmatprep.subr.bf16.mxu0 0
    %118 = vmatpush1.bf16.msra.mxu0 0
    %119 = vmatprep.subr.bf16.mxu0 0
    %120 = vmatpush1.bf16.msra.mxu0 0
    %121 = vmatprep.subr.bf16.mxu0 0
    %122 = vmatpush1.bf16.msra.mxu0 0
    %123 = vmatprep.subr.bf16.mxu0 0
    %124 = vmatpush1.bf16.msra.mxu0 0
    %125 = vmatprep.subr.bf16.mxu0 0
    %126 = vmatpush1.bf16.msra.mxu0 0
    %127 = vmatprep.subr.bf16.mxu0 0
    %128 = vmatpush1.bf16.msra.mxu0 0
    %129 = vmatprep.subr.bf16.mxu0 0
    %130 = vmatpush1.bf16.msra.mxu0 0
    %131 = vmatprep.mubr.bf16.mxu0 0
    %132 = vmatmul.mubr.bf16.gmra.mrb[0].mxu0 %v97
    %v133 = vpop.f32.mrb[0].mxu0
    %v134 = vadd.f32 %v87, %v133
    %v135 = vpop.f32.mrb[0].mxu0
    %v136 = vpop.f32.mrb[0].mxu0
    %v137 = vpop.f32.mrb[0].mxu0
    %138 = vdwg.mxu0
    %v139 = vmax.f32 %v134, 0.0
    %v140 = vpack.c.bf16 %v139, %v139
    %v141 = vld [vmem:[#allocation7] sm:$0xf]
    %v142 = vld [vmem:[#allocation7 + $0x4] sm:$0xf]
    %v143 = vld [vmem:[#allocation7 + $0x8] sm:$0xf]
    %v144 = vld [vmem:[#allocation7 + $0xc] sm:$0xf]
    %v145 = vld [vmem:[#allocation7 + $0x10] sm:$0xf]
    %v146 = vld [vmem:[#allocation7 + $0x14] sm:$0xf]
    %v147 = vld [vmem:[#allocation7 + $0x18] sm:$0xf]
    %v148 = vld [vmem:[#allocation7 + $0x1c] sm:$0xf]
    %v149 = vld [vmem:[#allocation7 + $0x20] sm:$0xf]
    %v150 = vld [vmem:[#allocation7 + $0x24] sm:$0xf]
    %v151 = vld [vmem:[#allocation7 + $0x28] sm:$0xf]
    %v152 = vld [vmem:[#allocation7 + $0x2c] sm:$0xf]
    %v153 = vld [vmem:[#allocation7 + $0x30] sm:$0xf]
    %v154 = vld [vmem:[#allocation7 + $0x34] sm:$0xf]
    %v155 = vld [vmem:[#allocation7 + $0x38] sm:$0xf]
    %v156 = vld [vmem:[#allocation7 + $0x3c] sm:$0xf]
    %s157 = scalar_lea.vmem %s4, 1
    %v158 = vld [vmem:[%s157] sm:$0x1]
    %v160 = vlaneseq
    %v161 = vshrl.u32 %v160, 7
    %v162 = vsub.s32 0, %v161
    %v163 = vrot.slane %v158, %v162
    %v181 = vunpack.c.l.b16 %v141
    %v182 = vunpack.c.l.b16 %v142
    %v183 = vunpack.c.l.b16 %v143
    %v184 = vunpack.c.l.b16 %v144
    %v185 = vunpack.c.l.b16 %v145
    %v186 = vunpack.c.l.b16 %v146
    %v187 = vunpack.c.l.b16 %v147
    %v188 = vunpack.c.l.b16 %v148
    %v189 = vunpack.c.l.b16 %v149
    %v190 = vunpack.c.l.b16 %v150
    %v191 = vunpack.c.l.b16 %v151
    %v192 = vunpack.c.l.b16 %v152
    %v193 = vunpack.c.l.b16 %v153
    %v194 = vunpack.c.l.b16 %v154
    %v195 = vunpack.c.l.b16 %v155
    %v196 = vunpack.c.l.b16 %v156
    %v197 = vpack.c.b16 %v182, %v181
    %v198 = vpack.c.b16 %v184, %v183
    %v199 = vpack.c.b16 %v186, %v185
    %v200 = vpack.c.b16 %v188, %v187
    %v201 = vpack.c.b16 %v190, %v189
    %v202 = vpack.c.b16 %v192, %v191
    %v203 = vpack.c.b16 %v194, %v193
    %v204 = vpack.c.b16 %v196, %v195
    %213 = vmatprep.subr.bf16.mxu0 0
    %214 = vmatpush1.bf16.msra.mxu0 %v197
    %215 = vmatprep.subr.bf16.mxu0 0
    %216 = vmatpush1.bf16.msra.mxu0 %v198
    %217 = vmatprep.subr.bf16.mxu0 0
    %218 = vmatpush1.bf16.msra.mxu0 %v199
    %219 = vmatprep.subr.bf16.mxu0 0
    %220 = vmatpush1.bf16.msra.mxu0 %v200
    %221 = vmatprep.subr.bf16.mxu0 0
    %222 = vmatpush1.bf16.msra.mxu0 %v201
    %223 = vmatprep.subr.bf16.mxu0 0
    %224 = vmatpush1.bf16.msra.mxu0 %v202
    %225 = vmatprep.subr.bf16.mxu0 0
    %226 = vmatpush1.bf16.msra.mxu0 %v203
    %227 = vmatprep.subr.bf16.mxu0 0
    %228 = vmatpush1.bf16.msra.mxu0 %v204
    %229 = vmatprep.subr.bf16.mxu0 0
    %230 = vmatpush1.bf16.msra.mxu0 0
    %231 = vmatprep.subr.bf16.mxu0 0
    %232 = vmatpush1.bf16.msra.mxu0 0
    %233 = vmatprep.subr.bf16.mxu0 0
    %234 = vmatpush1.bf16.msra.mxu0 0
    %235 = vmatprep.subr.bf16.mxu0 0
    %236 = vmatpush1.bf16.msra.mxu0 0
    %237 = vmatprep.subr.bf16.mxu0 0
    %238 = vmatpush1.bf16.msra.mxu0 0
    %239 = vmatprep.subr.bf16.mxu0 0
    %240 = vmatpush1.bf16.msra.mxu0 0
    %241 = vmatprep.subr.bf16.mxu0 0
    %242 = vmatpush1.bf16.msra.mxu0 0
    %243 = vmatprep.subr.bf16.mxu0 0
    %244 = vmatpush1.bf16.msra.mxu0 0
    %245 = vmatprep.mubr.bf16.mxu0 0
    %246 = vmatmul.mubr.bf16.gmra.mrb[0].mxu0 %v140
    %v247 = vpop.f32.mrb[0].mxu0
    %v248 = vadd.f32 %v163, %v247
    %v249 = vpop.f32.mrb[0].mxu0
    %v250 = vpop.f32.mrb[0].mxu0
    %v251 = vpop.f32.mrb[0].mxu0
    %252 = vdwg.mxu0
    %v253 = vmax.f32 %v248, 0.0
    %v254 = vpack.c.bf16 %v253, %v253
    %v255 = vld [vmem:[#allocation8] sm:$0xf]
    %v256 = vld [vmem:[#allocation8 + $0x4] sm:$0xf]
    %v257 = vld [vmem:[#allocation8 + $0x8] sm:$0xf]
    %v258 = vld [vmem:[#allocation8 + $0xc] sm:$0xf]
    %v259 = vld [vmem:[#allocation8 + $0x10] sm:$0xf]
    %v260 = vld [vmem:[#allocation8 + $0x14] sm:$0xf]
    %v261 = vld [vmem:[#allocation8 + $0x18] sm:$0xf]
    %v262 = vld [vmem:[#allocation8 + $0x1c] sm:$0xf]
    %v263 = vld [vmem:[#allocation8 + $0x20] sm:$0xf]
    %v264 = vld [vmem:[#allocation8 + $0x24] sm:$0xf]
    %v265 = vld [vmem:[#allocation8 + $0x28] sm:$0xf]
    %v266 = vld [vmem:[#allocation8 + $0x2c] sm:$0xf]
    %v267 = vld [vmem:[#allocation8 + $0x30] sm:$0xf]
    %v268 = vld [vmem:[#allocation8 + $0x34] sm:$0xf]
    %v269 = vld [vmem:[#allocation8 + $0x38] sm:$0xf]
    %v270 = vld [vmem:[#allocation8 + $0x3c] sm:$0xf]
    %v271 = vld [vmem:[%s5] sm:$0x1]
    %v273 = vlaneseq
    %v274 = vshrl.u32 %v273, 7
    %v275 = vsub.s32 0, %v274
    %v276 = vrot.slane %v271, %v275
    %v294 = vunpack.c.l.b16 %v255
    %v295 = vunpack.c.l.b16 %v256
    %v296 = vunpack.c.l.b16 %v257
    %v297 = vunpack.c.l.b16 %v258
    %v298 = vunpack.c.l.b16 %v259
    %v299 = vunpack.c.l.b16 %v260
    %v300 = vunpack.c.l.b16 %v261
    %v301 = vunpack.c.l.b16 %v262
    %v302 = vunpack.c.l.b16 %v263
    %v303 = vunpack.c.l.b16 %v264
    %v304 = vunpack.c.l.b16 %v265
    %v305 = vunpack.c.l.b16 %v266
    %v306 = vunpack.c.l.b16 %v267
    %v307 = vunpack.c.l.b16 %v268
    %v308 = vunpack.c.l.b16 %v269
    %v309 = vunpack.c.l.b16 %v270
    %v310 = vpack.c.b16 %v295, %v294
    %v311 = vpack.c.b16 %v297, %v296
    %v312 = vpack.c.b16 %v299, %v298
    %v313 = vpack.c.b16 %v301, %v300
    %v314 = vpack.c.b16 %v303, %v302
    %v315 = vpack.c.b16 %v305, %v304
    %v316 = vpack.c.b16 %v307, %v306
    %v317 = vpack.c.b16 %v309, %v308
    %326 = vmatprep.subr.bf16.mxu0 0
    %327 = vmatpush1.bf16.msra.mxu0 %v310
    %328 = vmatprep.subr.bf16.mxu0 0
    %329 = vmatpush1.bf16.msra.mxu0 %v311
    %330 = vmatprep.subr.bf16.mxu0 0
    %331 = vmatpush1.bf16.msra.mxu0 %v312
    %332 = vmatprep.subr.bf16.mxu0 0
    %333 = vmatpush1.bf16.msra.mxu0 %v313
    %334 = vmatprep.subr.bf16.mxu0 0
    %335 = vmatpush1.bf16.msra.mxu0 %v314
    %336 = vmatprep.subr.bf16.mxu0 0
    %337 = vmatpush1.bf16.msra.mxu0 %v315
    %338 = vmatprep.subr.bf16.mxu0 0
    %339 = vmatpush1.bf16.msra.mxu0 %v316
    %340 = vmatprep.subr.bf16.mxu0 0
    %341 = vmatpush1.bf16.msra.mxu0 %v317
    %342 = vmatprep.subr.bf16.mxu0 0
    %343 = vmatpush1.bf16.msra.mxu0 0
    %344 = vmatprep.subr.bf16.mxu0 0
    %345 = vmatpush1.bf16.msra.mxu0 0
    %346 = vmatprep.subr.bf16.mxu0 0
    %347 = vmatpush1.bf16.msra.mxu0 0
    %348 = vmatprep.subr.bf16.mxu0 0
    %349 = vmatpush1.bf16.msra.mxu0 0
    %350 = vmatprep.subr.bf16.mxu0 0
    %351 = vmatpush1.bf16.msra.mxu0 0
    %352 = vmatprep.subr.bf16.mxu0 0
    %353 = vmatpush1.bf16.msra.mxu0 0
    %354 = vmatprep.subr.bf16.mxu0 0
    %355 = vmatpush1.bf16.msra.mxu0 0
    %356 = vmatprep.subr.bf16.mxu0 0
    %357 = vmatpush1.bf16.msra.mxu0 0
    %358 = vmatprep.mubr.bf16.mxu0 0
    %359 = vmatmul.mubr.bf16.gmra.mrb[0].mxu0 %v254
    %v360 = vpop.f32.mrb[0].mxu0
    %v361 = vadd.f32 %v276, %v360
    %v362 = vpop.f32.mrb[0].mxu0
    %v363 = vpop.f32.mrb[0].mxu0
    %v364 = vpop.f32.mrb[0].mxu0
    %365 = vdwg.mxu0
    %s366 = scalar_lea.vmem %s5, 1
    %v367 = vld [vmem:[%s366] sm:$0x1]
    %s368 = scalar_lea.vmem %s5, 2
    %v369 = vld [vmem:[%s368] sm:$0x1]
    %v371 = vlaneseq
    %v372 = vshrl.u32 %v371, 7
    %v373 = vsub.s32 0, %v372
    %v374 = vrot.slane %v367, %v373
    %v376 = vmax.f32 %v374, %v361
    %v378 = vlaneseq
    %v379 = vshrl.u32 %v378, 7
    %v380 = vsub.s32 0, %v379
    %v381 = vrot.slane %v369, %v380
    %v383 = vmin.f32 %v381, %v376
    %384 = vst [vmem:[#allocation10] sm:$0xff] %v383
    // Predicated region
    $region42: #{tpu_custom_call.1} parent=1 // pred_check
      _
    $region43: #{tpu_custom_call.1} parent=1 // pred_check_branch
      %386 = sbr.rel (0) target = $region45
    $region44: #{tpu_custom_call.1} parent=1 // pred_region
      %s388 = ssub.s32 128, 128
      %389 = vsyncadd [#allocation4], %s388
      %s391 = sshll.u32 [#allocation10], 4
      %s392 = int_to_ptr.vmem [resolvable:$true] %s391
      %394 = dma.vmem_to_hbm [thread:$0]  %s392, 128, %s6, [#allocation4]
    $region45: #{tpu_custom_call.1} parent=1 // pred_fallthru
      _
    // Predicated region
    $region46: #{tpu_custom_call.1} parent=1 // pred_check
      _
    $region47: #{tpu_custom_call.1} parent=1 // pred_check_branch
      %396 = sbr.rel (0) target = $region49
    $region48: #{tpu_custom_call.1} parent=1 // pred_region
      %397 = dma.done [#allocation4], 128
    $region49: #{tpu_custom_call.1} parent=1 // pred_fallthru
      _
    %398 = vsyncpa [#allocation3], 1
    %399 = vsyncpa [#allocation6], 1
    %400 = vsyncpa [#allocation9], 1
    %401 = vsyncpa [#allocation4], 1

// kernel: tpu_custom_call.1
$region0: #{tpu_custom_call.1}
  #allocation0 [shape = 'u32[]', space=smem, size = 0x4, offset = 0x4, fixed_abs, tag = 'smem constant byte address 0x4 - core index']
  #allocation1 [shape = 'u32[144,128]{1,0:T(1,128)}', space=vmem, size = 0x12000, scoped, tag = 'internal scratch']
  %s0 = inlined_call_operand.hbm [shape: f32[8,16], index: 0, kind: input, shape index: {}]
  %s1 = inlined_call_operand.hbm [shape: bf16[16,128], index: 1, kind: input, shape index: {}]
  %s2 = inlined_call_operand.hbm [shape: bf16[1,128,128], index: 2, kind: input, shape index: {}]
  %s3 = inlined_call_operand.hbm [shape: bf16[128,128], index: 3, kind: input, shape index: {}]
  %s4 = inlined_call_operand.vmem [shape: f32[2,1,128], index: 4, kind: input, shape index: {}]
  %s5 = inlined_call_operand.vmem [shape: f32[3,1,128], index: 5, kind: input, shape index: {}]
  %s6 = inlined_call_operand.hbm [shape: f32[8,128], index: 6, kind: output, shape index: {}]
  %s7 = sld [smem:[#allocation0]]
  $region50: #{tpu_custom_call.1} parent=0
    _
  %s9 = ssub.s32 1, %s7
  %s10 = scalar_select 0, %s9, %s7
  $region1: #{tpu_custom_call.1} parent=0
    #allocation2 [shape = 'u8[4096]{0}', space=vmem, size = 0x1000, scoped, tag = 'input window, operand 0, single buffered']
    #allocation3 [shape = 's32[1]{0}', space=sflag, size = 0x4, scoped, tag = 'scoped memory for tpu_custom_call.1']
    #allocation4 [shape = 's32[1]{0}', space=sflag, size = 0x4, scoped, tag = 'scoped memory for tpu_custom_call.1']
    #allocation5 [shape = 'u8[4096]{0}', space=vmem, size = 0x1000, scoped, tag = 'input window, operand 1, single buffered']
    #allocation6 [shape = 's32[1]{0}', space=sflag, size = 0x4, scoped, tag = 'scoped memory for tpu_custom_call.1']
    #allocation7 [shape = 'u8[32768]{0}', space=vmem, size = 0x8000, scoped, tag = 'input window, operand 2, single buffered']
    #allocation8 [shape = 'u8[32768]{0}', space=vmem, size = 0x8000, scoped, tag = 'input window, operand 3, single buffered']
    #allocation9 [shape = 's32[1]{0}', space=sflag, size = 0x4, scoped, tag = 'scoped memory for tpu_custom_call.1']
    #allocation10 [shape = 'u8[4096]{0}', space=vmem, size = 0x1000, scoped, tag = 'output window, operand 0, single buffered']
    %11 = vsyncpa [#allocation3], 0
    %12 = vsyncpa [#allocation6], 0
    %13 = vsyncpa [#allocation9], 0
    %14 = vsyncpa [#allocation4], 0
    // Predicated region
    $region2: #{tpu_custom_call.1} parent=1 // pred_check
      _
    $region3: #{tpu_custom_call.1} parent=1 // pred_check_branch
      %16 = sbr.rel (0) target = $region5
    $region4: #{tpu_custom_call.1} parent=1 // pred_region
      %s18 = ssub.s32 128, 128
      %19 = vsyncadd [#allocation3], %s18
      %s21 = sshll.u32 [#allocation2], 4
      %s22 = int_to_ptr.vmem [resolvable:$true] %s21
      %24 = dma.hbm_to_vmem [thread:$0]  %s0, 128, %s22, [#allocation3]
    $region5: #{tpu_custom_call.1} parent=1 // pred_fallthru
      _
    // Predicated region
    $region6: #{tpu_custom_call.1} parent=1 // pred_check
      _
    $region7: #{tpu_custom_call.1} parent=1 // pred_check_branch
      %26 = sbr.rel (0) target = $region9
    $region8: #{tpu_custom_call.1} parent=1 // pred_region
      %s28 = ssub.s32 128, 128
      %29 = vsyncadd [#allocation6], %s28
      %s30 = sshll.u32 [#allocation5], 4
      %s31 = int_to_ptr.vmem [resolvable:$true] %s30
      %36 = dma.hbm_to_vmem [thread:$0]  %s1, 128, %s31, [#allocation6], 64, 64, 4
    $region9: #{tpu_custom_call.1} parent=1 // pred_fallthru
      _
    // Predicated region
    $region10: #{tpu_custom_call.1} parent=1 // pred_check
      _
    $region11: #{tpu_custom_call.1} parent=1 // pred_check_branch
      %38 = sbr.rel (0) target = $region13
    $region12: #{tpu_custom_call.1} parent=1 // pred_region
      %s40 = ssub.s32 1024, 1024
      %41 = vsyncadd [#allocation6], %s40
      %s42 = sshll.u32 [#allocation7], 4
      %s43 = int_to_ptr.vmem [resolvable:$true] %s42
      %48 = dma.hbm_to_vmem [thread:$0]  %s2, 1024, %s43, [#allocation6], 64, 64, 4
    $region13: #{tpu_custom_call.1} parent=1 // pred_fallthru
      _
    // Predicated region
    $region14: #{tpu_custom_call.1} parent=1 // pred_check
      _
    $region15: #{tpu_custom_call.1} parent=1 // pred_check_branch
      %50 = sbr.rel (0) target = $region17
    $region16: #{tpu_custom_call.1} parent=1 // pred_region
      %s52 = ssub.s32 1024, 1024
      %53 = vsyncadd [#allocation9], %s52
      %s54 = sshll.u32 [#allocation8], 4
      %s55 = int_to_ptr.vmem [resolvable:$true] %s54
      %60 = dma.hbm_to_vmem [thread:$0]  %s3, 1024, %s55, [#allocation9], 64, 64, 4
    $region17: #{tpu_custom_call.1} parent=1 // pred_fallthru
      _
    // Predicated region
    $region18: #{tpu_custom_call.1} parent=1 // pred_check
      _
    $region19: #{tpu_custom_call.1} parent=1 // pred_check_branch
      %62 = sbr.rel (0) target = $region21
    $region20: #{tpu_custom_call.1} parent=1 // pred_region
      _
    $region21: #{tpu_custom_call.1} parent=1 // pred_fallthru
      _
    // Predicated region
    $region22: #{tpu_custom_call.1} parent=1 // pred_check
      _
    $region23: #{tpu_custom_call.1} parent=1 // pred_check_branch
      %64 = sbr.rel (0) target = $region25
    $region24: #{tpu_custom_call.1} parent=1 // pred_region
      _
    $region25: #{tpu_custom_call.1} parent=1 // pred_fallthru
      _
    // Predicated region
    $region26: #{tpu_custom_call.1} parent=1 // pred_check
      _
    $region27: #{tpu_custom_call.1} parent=1 // pred_check_branch
      %66 = sbr.rel (0) target = $region29
    $region28: #{tpu_custom_call.1} parent=1 // pred_region
      %67 = dma.done [#allocation3], 128
    $region29: #{tpu_custom_call.1} parent=1 // pred_fallthru
      _
    // Predicated region
    $region30: #{tpu_custom_call.1} parent=1 // pred_check
      _
    $region31: #{tpu_custom_call.1} parent=1 // pred_check_branch
      %69 = sbr.rel (0) target = $region33
    $region32: #{tpu_custom_call.1} parent=1 // pred_region
      %70 = dma.done [#allocation6], 128
    $region33: #{tpu_custom_call.1} parent=1 // pred_fallthru
      _
    // Predicated region
    $region34: #{tpu_custom_call.1} parent=1 // pred_check
      _
    $region35: #{tpu_custom_call.1} parent=1 // pred_check_branch
      %72 = sbr.rel (0) target = $region37
    $region36: #{tpu_custom_call.1} parent=1 // pred_region
      %73 = dma.done [#allocation6], 1024
    $region37: #{tpu_custom_call.1} parent=1 // pred_fallthru
      _
    // Predicated region
    $region38: #{tpu_custom_call.1} parent=1 // pred_check
      _
    $region39: #{tpu_custom_call.1} parent=1 // pred_check_branch
      %75 = sbr.rel (0) target = $region41
    $region40: #{tpu_custom_call.1} parent=1 // pred_region
      %76 = dma.done [#allocation9], 1024
    $region41: #{tpu_custom_call.1} parent=1 // pred_fallthru
      _
    %v78 = vld [vmem:[#allocation2] sm:$0xff]
    %v79 = vpack.c.bf16 %v78, %v78
    %v80 = vld [vmem:[#allocation5] sm:$0xf]
    %v81 = vld [vmem:[#allocation5 + $0x4] sm:$0xf]
    %v82 = vld [vmem:[%s4] sm:$0x1]
    %v84 = vlaneseq
    %v85 = vshrl.u32 %v84, 7
    %v86 = vsub.s32 0, %v85
    %v87 = vrot.slane %v82, %v86
    %v91 = vunpack.c.l.b16 %v80
    %v92 = vunpack.c.l.b16 %v81
    %v93 = vpack.c.b16 %v92, %v91
    %vm95 = vcmask 130048
    %v97 = vsel %vm95, %v79, 0
    %99 = vmatprep.subr.bf16.mxu0 0
    %100 = vmatpush1.bf16.msra.mxu0 %v93
    %101 = vmatprep.subr.bf16.mxu0 0
    %102 = vmatpush1.bf16.msra.mxu0 0
    %103 = vmatprep.subr.bf16.mxu0 0
    %104 = vmatpush1.bf16.msra.mxu0 0
    %105 = vmatprep.subr.bf16.mxu0 0
    %106 = vmatpush1.bf16.msra.mxu0 0
    %107 = vmatprep.subr.bf16.mxu0 0
    %108 = vmatpush1.bf16.msra.mxu0 0
    %109 = vmatprep.subr.bf16.mxu0 0
    %110 = vmatpush1.bf16.msra.mxu0 0
    %111 = vmatprep.subr.bf16.mxu0 0
    %112 = vmatpush1.bf16.msra.mxu0 0
    %113 = vmatprep.subr.bf16.mxu0 0
    %114 = vmatpush1.bf16.msra.mxu0 0
    %115 = vmatprep.subr.bf16.mxu0 0
    %116 = vmatpush1.bf16.msra.mxu0 0
    %117 = vmatprep.subr.bf16.mxu0 0
    %118 = vmatpush1.bf16.msra.mxu0 0
    %119 = vmatprep.subr.bf16.mxu0 0
    %120 = vmatpush1.bf16.msra.mxu0 0
    %121 = vmatprep.subr.bf16.mxu0 0
    %122 = vmatpush1.bf16.msra.mxu0 0
    %123 = vmatprep.subr.bf16.mxu0 0
    %124 = vmatpush1.bf16.msra.mxu0 0
    %125 = vmatprep.subr.bf16.mxu0 0
    %126 = vmatpush1.bf16.msra.mxu0 0
    %127 = vmatprep.subr.bf16.mxu0 0
    %128 = vmatpush1.bf16.msra.mxu0 0
    %129 = vmatprep.subr.bf16.mxu0 0
    %130 = vmatpush1.bf16.msra.mxu0 0
    %131 = vmatprep.mubr.bf16.mxu0 0
    %132 = vmatmul.mubr.bf16.gmra.mrb[0].mxu0 %v97
    %v133 = vpop.f32.mrb[0].mxu0
    %v134 = vadd.f32 %v87, %v133
    %v135 = vpop.f32.mrb[0].mxu0
    %v136 = vpop.f32.mrb[0].mxu0
    %v137 = vpop.f32.mrb[0].mxu0
    %138 = vdwg.mxu0
    %v139 = vmax.f32 %v134, 0.0
    %v140 = vpack.c.bf16 %v139, %v139
    %v141 = vld [vmem:[#allocation7] sm:$0xf]
    %v142 = vld [vmem:[#allocation7 + $0x4] sm:$0xf]
    %v143 = vld [vmem:[#allocation7 + $0x8] sm:$0xf]
    %v144 = vld [vmem:[#allocation7 + $0xc] sm:$0xf]
    %v145 = vld [vmem:[#allocation7 + $0x10] sm:$0xf]
    %v146 = vld [vmem:[#allocation7 + $0x14] sm:$0xf]
    %v147 = vld [vmem:[#allocation7 + $0x18] sm:$0xf]
    %v148 = vld [vmem:[#allocation7 + $0x1c] sm:$0xf]
    %v149 = vld [vmem:[#allocation7 + $0x20] sm:$0xf]
    %v150 = vld [vmem:[#allocation7 + $0x24] sm:$0xf]
    %v151 = vld [vmem:[#allocation7 + $0x28] sm:$0xf]
    %v152 = vld [vmem:[#allocation7 + $0x2c] sm:$0xf]
    %v153 = vld [vmem:[#allocation7 + $0x30] sm:$0xf]
    %v154 = vld [vmem:[#allocation7 + $0x34] sm:$0xf]
    %v155 = vld [vmem:[#allocation7 + $0x38] sm:$0xf]
    %v156 = vld [vmem:[#allocation7 + $0x3c] sm:$0xf]
    %s157 = scalar_lea.vmem %s4, 1
    %v158 = vld [vmem:[%s157] sm:$0x1]
    %v160 = vlaneseq
    %v161 = vshrl.u32 %v160, 7
    %v162 = vsub.s32 0, %v161
    %v163 = vrot.slane %v158, %v162
    %v181 = vunpack.c.l.b16 %v141
    %v182 = vunpack.c.l.b16 %v142
    %v183 = vunpack.c.l.b16 %v143
    %v184 = vunpack.c.l.b16 %v144
    %v185 = vunpack.c.l.b16 %v145
    %v186 = vunpack.c.l.b16 %v146
    %v187 = vunpack.c.l.b16 %v147
    %v188 = vunpack.c.l.b16 %v148
    %v189 = vunpack.c.l.b16 %v149
    %v190 = vunpack.c.l.b16 %v150
    %v191 = vunpack.c.l.b16 %v151
    %v192 = vunpack.c.l.b16 %v152
    %v193 = vunpack.c.l.b16 %v153
    %v194 = vunpack.c.l.b16 %v154
    %v195 = vunpack.c.l.b16 %v155
    %v196 = vunpack.c.l.b16 %v156
    %v197 = vpack.c.b16 %v182, %v181
    %v198 = vpack.c.b16 %v184, %v183
    %v199 = vpack.c.b16 %v186, %v185
    %v200 = vpack.c.b16 %v188, %v187
    %v201 = vpack.c.b16 %v190, %v189
    %v202 = vpack.c.b16 %v192, %v191
    %v203 = vpack.c.b16 %v194, %v193
    %v204 = vpack.c.b16 %v196, %v195
    %213 = vmatprep.subr.bf16.mxu0 0
    %214 = vmatpush1.bf16.msra.mxu0 %v197
    %215 = vmatprep.subr.bf16.mxu0 0
    %216 = vmatpush1.bf16.msra.mxu0 %v198
    %217 = vmatprep.subr.bf16.mxu0 0
    %218 = vmatpush1.bf16.msra.mxu0 %v199
    %219 = vmatprep.subr.bf16.mxu0 0
    %220 = vmatpush1.bf16.msra.mxu0 %v200
    %221 = vmatprep.subr.bf16.mxu0 0
    %222 = vmatpush1.bf16.msra.mxu0 %v201
    %223 = vmatprep.subr.bf16.mxu0 0
    %224 = vmatpush1.bf16.msra.mxu0 %v202
    %225 = vmatprep.subr.bf16.mxu0 0
    %226 = vmatpush1.bf16.msra.mxu0 %v203
    %227 = vmatprep.subr.bf16.mxu0 0
    %228 = vmatpush1.bf16.msra.mxu0 %v204
    %229 = vmatprep.subr.bf16.mxu0 0
    %230 = vmatpush1.bf16.msra.mxu0 0
    %231 = vmatprep.subr.bf16.mxu0 0
    %232 = vmatpush1.bf16.msra.mxu0 0
    %233 = vmatprep.subr.bf16.mxu0 0
    %234 = vmatpush1.bf16.msra.mxu0 0
    %235 = vmatprep.subr.bf16.mxu0 0
    %236 = vmatpush1.bf16.msra.mxu0 0
    %237 = vmatprep.subr.bf16.mxu0 0
    %238 = vmatpush1.bf16.msra.mxu0 0
    %239 = vmatprep.subr.bf16.mxu0 0
    %240 = vmatpush1.bf16.msra.mxu0 0
    %241 = vmatprep.subr.bf16.mxu0 0
    %242 = vmatpush1.bf16.msra.mxu0 0
    %243 = vmatprep.subr.bf16.mxu0 0
    %244 = vmatpush1.bf16.msra.mxu0 0
    %245 = vmatprep.mubr.bf16.mxu0 0
    %246 = vmatmul.mubr.bf16.gmra.mrb[0].mxu0 %v140
    %v247 = vpop.f32.mrb[0].mxu0
    %v248 = vadd.f32 %v163, %v247
    %v249 = vpop.f32.mrb[0].mxu0
    %v250 = vpop.f32.mrb[0].mxu0
    %v251 = vpop.f32.mrb[0].mxu0
    %252 = vdwg.mxu0
    %v253 = vmax.f32 %v248, 0.0
    %v254 = vpack.c.bf16 %v253, %v253
    %v255 = vld [vmem:[#allocation8] sm:$0xf]
    %v256 = vld [vmem:[#allocation8 + $0x4] sm:$0xf]
    %v257 = vld [vmem:[#allocation8 + $0x8] sm:$0xf]
    %v258 = vld [vmem:[#allocation8 + $0xc] sm:$0xf]
    %v259 = vld [vmem:[#allocation8 + $0x10] sm:$0xf]
    %v260 = vld [vmem:[#allocation8 + $0x14] sm:$0xf]
    %v261 = vld [vmem:[#allocation8 + $0x18] sm:$0xf]
    %v262 = vld [vmem:[#allocation8 + $0x1c] sm:$0xf]
    %v263 = vld [vmem:[#allocation8 + $0x20] sm:$0xf]
    %v264 = vld [vmem:[#allocation8 + $0x24] sm:$0xf]
    %v265 = vld [vmem:[#allocation8 + $0x28] sm:$0xf]
    %v266 = vld [vmem:[#allocation8 + $0x2c] sm:$0xf]
    %v267 = vld [vmem:[#allocation8 + $0x30] sm:$0xf]
    %v268 = vld [vmem:[#allocation8 + $0x34] sm:$0xf]
    %v269 = vld [vmem:[#allocation8 + $0x38] sm:$0xf]
    %v270 = vld [vmem:[#allocation8 + $0x3c] sm:$0xf]
    %v271 = vld [vmem:[%s5] sm:$0x1]
    %v273 = vlaneseq
    %v274 = vshrl.u32 %v273, 7
    %v275 = vsub.s32 0, %v274
    %v276 = vrot.slane %v271, %v275
    %v294 = vunpack.c.l.b16 %v255
    %v295 = vunpack.c.l.b16 %v256
    %v296 = vunpack.c.l.b16 %v257
    %v297 = vunpack.c.l.b16 %v258
    %v298 = vunpack.c.l.b16 %v259
    %v299 = vunpack.c.l.b16 %v260
    %v300 = vunpack.c.l.b16 %v261
    %v301 = vunpack.c.l.b16 %v262
    %v302 = vunpack.c.l.b16 %v263
    %v303 = vunpack.c.l.b16 %v264
    %v304 = vunpack.c.l.b16 %v265
    %v305 = vunpack.c.l.b16 %v266
    %v306 = vunpack.c.l.b16 %v267
    %v307 = vunpack.c.l.b16 %v268
    %v308 = vunpack.c.l.b16 %v269
    %v309 = vunpack.c.l.b16 %v270
    %v310 = vpack.c.b16 %v295, %v294
    %v311 = vpack.c.b16 %v297, %v296
    %v312 = vpack.c.b16 %v299, %v298
    %v313 = vpack.c.b16 %v301, %v300
    %v314 = vpack.c.b16 %v303, %v302
    %v315 = vpack.c.b16 %v305, %v304
    %v316 = vpack.c.b16 %v307, %v306
    %v317 = vpack.c.b16 %v309, %v308
    %326 = vmatprep.subr.bf16.mxu0 0
    %327 = vmatpush1.bf16.msra.mxu0 %v310
    %328 = vmatprep.subr.bf16.mxu0 0
    %329 = vmatpush1.bf16.msra.mxu0 %v311
    %330 = vmatprep.subr.bf16.mxu0 0
    %331 = vmatpush1.bf16.msra.mxu0 %v312
    %332 = vmatprep.subr.bf16.mxu0 0
    %333 = vmatpush1.bf16.msra.mxu0 %v313
    %334 = vmatprep.subr.bf16.mxu0 0
    %335 = vmatpush1.bf16.msra.mxu0 %v314
    %336 = vmatprep.subr.bf16.mxu0 0
    %337 = vmatpush1.bf16.msra.mxu0 %v315
    %338 = vmatprep.subr.bf16.mxu0 0
    %339 = vmatpush1.bf16.msra.mxu0 %v316
    %340 = vmatprep.subr.bf16.mxu0 0
    %341 = vmatpush1.bf16.msra.mxu0 %v317
    %342 = vmatprep.subr.bf16.mxu0 0
    %343 = vmatpush1.bf16.msra.mxu0 0
    %344 = vmatprep.subr.bf16.mxu0 0
    %345 = vmatpush1.bf16.msra.mxu0 0
    %346 = vmatprep.subr.bf16.mxu0 0
    %347 = vmatpush1.bf16.msra.mxu0 0
    %348 = vmatprep.subr.bf16.mxu0 0
    %349 = vmatpush1.bf16.msra.mxu0 0
    %350 = vmatprep.subr.bf16.mxu0 0
    %351 = vmatpush1.bf16.msra.mxu0 0
    %352 = vmatprep.subr.bf16.mxu0 0
    %353 = vmatpush1.bf16.msra.mxu0 0
    %354 = vmatprep.subr.bf16.mxu0 0
    %355 = vmatpush1.bf16.msra.mxu0 0
    %356 = vmatprep.subr.bf16.mxu0 0
    %357 = vmatpush1.bf16.msra.mxu0 0
    %358 = vmatprep.mubr.bf16.mxu0 0
    %359 = vmatmul.mubr.bf16.gmra.mrb[0].mxu0 %v254
    %v360 = vpop.f32.mrb[0].mxu0
    %v361 = vadd.f32 %v276, %v360
    %v362 = vpop.f32.mrb[0].mxu0
    %v363 = vpop.f32.mrb[0].mxu0
    %v364 = vpop.f32.mrb[0].mxu0
    %365 = vdwg.mxu0
    %s366 = scalar_lea.vmem %s5, 1
    %v367 = vld [vmem:[%s366] sm:$0x1]
    %s368 = scalar_lea.vmem %s5, 2
    %v369 = vld [vmem:[%s368] sm:$0x1]
    %v371 = vlaneseq
    %v372 = vshrl.u32 %v371, 7
    %v373 = vsub.s32 0, %v372
    %v374 = vrot.slane %v367, %v373
    %v376 = vmax.f32 %v374, %v361
    %v378 = vlaneseq
    %v379 = vshrl.u32 %v378, 7
    %v380 = vsub.s32 0, %v379
    %v381 = vrot.slane %v369, %v380
    %v383 = vmin.f32 %v381, %v376
    %384 = vst [vmem:[#allocation10] sm:$0xff] %v383
    // Predicated region
    $region42: #{tpu_custom_call.1} parent=1 // pred_check
      _
    $region43: #{tpu_custom_call.1} parent=1 // pred_check_branch
      %386 = sbr.rel (0) target = $region45
    $region44: #{tpu_custom_call.1} parent=1 // pred_region
      %s388 = ssub.s32 128, 128
      %389 = vsyncadd [#allocation4], %s388
      %s391 = sshll.u32 [#allocation10], 4
      %s392 = int_to_ptr.vmem [resolvable:$true] %s391
      %394 = dma.vmem_to_hbm [thread:$0]  %s392, 128, %s6, [#allocation4]
    $region45: #{tpu_custom_call.1} parent=1 // pred_fallthru
      _
    // Predicated region
    $region46: #{tpu_custom_call.1} parent=1 // pred_check
      _
    $region47: #{tpu_custom_call.1} parent=1 // pred_check_branch
      %396 = sbr.rel (0) target = $region49
    $region48: #{tpu_custom_call.1} parent=1 // pred_region
      %397 = dma.done [#allocation4], 128
    $region49: #{tpu_custom_call.1} parent=1 // pred_fallthru
      _
    %398 = vsyncpa [#allocation3], 1
    %399 = vsyncpa [#allocation6], 1
    %400 = vsyncpa [#allocation9], 1
    %401 = vsyncpa [#allocation4], 1

</llo_original>
